<compile_context>
chip_gen: v7x
topology: tpu7x:2x2x1
jax: 0.10.0
libtpu: 0.0.40
codegen_flags: <defaults>
</compile_context>

<pallas_src>
import numpy as np
import jax
import jax.numpy as jnp
from jax.experimental import pallas as pl
from jax.experimental.pallas import tpu as pltpu


# ----------------------------- Pallas kernel --------------------------------
def pos_encoder_kernel(x_ref, wm_ref, b_ref, o_ref):
    # x_ref : (HW, lt)  input lane tile (f32 or bf16; upcast in VMEM)
    # wm_ref: (Cp, HW)  pre-fused (conv_weight @ bilinear_matrix), f32
    # b_ref : (Cp, 1)   conv bias, f32
    # o_ref : (Cp, lt)  written in the final (input) dtype
    x = x_ref[...].astype(jnp.float32)
    acc = jnp.dot(wm_ref[...], x, preferred_element_type=jnp.float32)
    o_ref[...] = (acc + b_ref[...]).astype(o_ref.dtype)


# -------------------------- tile-size selection ------------------------------
def _choose_lane_tile(total_lanes, HW, Cp, x_itemsize, out_itemsize,
                      cap, other_parallel):
    """Pick a lane tile (multiple of 128, divides total_lanes) that fits a
    conservative VMEM budget and leaves >=2 parallel grid steps if possible."""
    budget = 12 << 20                       # conservative; fits every gen's scoped default
    fixed = 2 * Cp * HW * 4 + 2 * Cp * 4    # wm + bias (double-buffered worst case)
    per_lane = 2 * (HW * x_itemsize + Cp * out_itemsize)   # double-buffered x/out tiles
    lt = max(128, (min(cap, total_lanes) // 128) * 128)
    while lt > 128 and fixed + per_lane * lt > budget:
        lt -= 128
    # v7x has 2 TensorCores: if no other parallel axis, ensure >=2 lane tiles.
    if other_parallel < 2:
        lt = min(lt, max(128, ((total_lanes // 2) // 128) * 128))
    # Largest multiple of 128 <= lt that evenly divides total_lanes (128 always does).
    while total_lanes % lt != 0:
        lt -= 128
    return lt


# ------------------------------- wrapper --------------------------------------
def fuse_pos_encoder_params(weight, bias, interp_mat):
    """One-time fusion of resize + 1x1 conv.  Call once, outside the hot path.
    weight: (Cp, HdWd); bias: (Cp,); interp_mat: (HdWd, HW).
    Returns wm (Cp, HW) f32 and bias2 (Cp, 1) f32 (wm kept in f32 for accuracy)."""
    wm = jnp.dot(weight.astype(jnp.float32), interp_mat.astype(jnp.float32))
    return wm, bias.reshape(-1, 1).astype(jnp.float32)


def pos_encoder_pallas(token_coef, wm, bias2, *, lane_tile=2048):
    """token_coef: (BN, 1, HW, L) (f32 or bf16); wm: (Cp, HW) f32; bias2: (Cp, 1) f32.
    Returns (BN, Cp, L) in token_coef.dtype."""
    BN, one, HW, L = token_coef.shape
    assert one == 1
    Cp = wm.shape[0]
    assert wm.shape == (Cp, HW)
    out_dtype = token_coef.dtype
    x_isz = token_coef.dtype.itemsize
    o_isz = jnp.dtype(out_dtype).itemsize

    # NOTE: wm/bias have constant index_maps so they are not re-DMA'd per step;
    # their second pipeline buffer is tiny here (accounted in the VMEM budget).

    if L >= 128:
        # ---- primary path: batched grid, no wrapper transpose ----
        Lp = ((L + 127) // 128) * 128
        x = token_coef.reshape(BN, HW, L)              # free squeeze
        if Lp != L:
            x = jnp.pad(x, ((0, 0), (0, 0), (0, Lp - L)))
        lt = _choose_lane_tile(Lp, HW, Cp, x_isz, o_isz,
                               cap=lane_tile, other_parallel=BN)
        out = pl.pallas_call(
            pos_encoder_kernel,
            out_shape=jax.ShapeDtypeStruct((BN, Cp, Lp), out_dtype),
            grid_spec=pltpu.PrefetchScalarGridSpec(
                num_scalar_prefetch=0,
                grid=(BN, Lp // lt),
                in_specs=[
                    pl.BlockSpec((pl.Squeezed(), HW, lt), lambda b, j: (b, 0, j)),
                    pl.BlockSpec((Cp, HW), lambda b, j: (0, 0)),
                    pl.BlockSpec((Cp, 1), lambda b, j: (0, 0)),
                ],
                out_specs=pl.BlockSpec((pl.Squeezed(), Cp, lt),
                                       lambda b, j: (b, 0, j)),
            ),
            compiler_params=pltpu.CompilerParams(
                dimension_semantics=("parallel", "parallel")),
        )(x, wm, bias2)
        # Padded lane columns (if any) hold bias values; drop them here.
        return out if Lp == L else out[:, :, :L]

    # ---- fallback path (L < 128): fold BN*L into lanes for lane-dense stores ----
    n = BN * L
    n128 = ((n + 127) // 128) * 128
    x_all = jnp.transpose(token_coef.reshape(BN, HW, L), (1, 0, 2)).reshape(HW, n)
    if n128 != n:
        x_all = jnp.pad(x_all, ((0, 0), (0, n128 - n)))
    lt = _choose_lane_tile(n128, HW, Cp, x_isz, o_isz,
                           cap=lane_tile, other_parallel=1)
    out = pl.pallas_call(
        pos_encoder_kernel,
        out_shape=jax.ShapeDtypeStruct((Cp, n128), out_dtype),
        grid_spec=pltpu.PrefetchScalarGridSpec(
            num_scalar_prefetch=0,
            grid=(n128 // lt,),
            in_specs=[
                pl.BlockSpec((HW, lt), lambda j: (0, j)),
                pl.BlockSpec((Cp, HW), lambda j: (0, 0)),
                pl.BlockSpec((Cp, 1), lambda j: (0, 0)),
            ],
            out_specs=pl.BlockSpec((Cp, lt), lambda j: (0, j)),
        ),
        compiler_params=pltpu.CompilerParams(
            dimension_semantics=("parallel",)),
    )(x_all, wm, bias2)
    # Padded lane columns contain the bias broadcast; sliced off here.
    out = out[:, :n].reshape(Cp, BN, L).transpose(1, 0, 2)
    return out


# ------------------------ glue: interpolation matrix -------------------------
def _linear_interp_matrix(dst, src):
    """1D linear-interp matrix (dst, src), PyTorch align_corners=True."""
    if dst == 1:
        coords = np.zeros((1,), dtype=np.float64)
    else:
        coords = np.arange(dst, dtype=np.float64) * (src - 1) / (dst - 1)
    i0 = np.clip(np.floor(coords).astype(np.int64), 0, src - 1)
    i1 = np.clip(i0 + 1, 0, src - 1)
    w = coords - i0
    M = np.zeros((dst, src), dtype=np.float64)
    M[np.arange(dst), i0] += 1.0 - w
    M[np.arange(dst), i1] += w
    return M


def build_bilinear_matrix(desire_size, input_size):
    Hd, Wd = desire_size
    H, W = input_size
    Mh = _linear_interp_matrix(Hd, H)
    Mw = _linear_interp_matrix(Wd, W)
    return jnp.asarray(np.kron(Mh, Mw), dtype=jnp.float32)   # (Hd*Wd, H*W)


# ----------------------------- numpy reference -------------------------------
def ref_forward(token_coef, input_size, desire_size, weight, bias):
    H, W = input_size
    Hd, Wd = desire_size
    tc = np.asarray(token_coef, dtype=np.float64)
    BN, _, HW, L = tc.shape
    x = tc[:, 0].transpose(0, 2, 1).reshape(BN, L, H, W)

    def coords(dst, src):
        if dst == 1:
            return np.zeros((dst,))
        return np.arange(dst) * (src - 1) / (dst - 1)

    ch, cw = coords(Hd, H), coords(Wd, W)
    h0 = np.clip(np.floor(ch).astype(int), 0, H - 1)
    h1 = np.clip(h0 + 1, 0, H - 1)
    w0 = np.clip(np.floor(cw).astype(int), 0, W - 1)
    w1 = np.clip(w0 + 1, 0, W - 1)
    ah = (ch - h0)[None, None, :, None]
    aw = (cw - w0)[None, None, None, :]
    top = x[:, :, h0][:, :, :, w0] * (1 - aw) + x[:, :, h0][:, :, :, w1] * aw
    bot = x[:, :, h1][:, :, :, w0] * (1 - aw) + x[:, :, h1][:, :, :, w1] * aw
    interp = top * (1 - ah) + bot * ah                         # (BN,L,Hd,Wd)
    flat = interp.reshape(BN, L, Hd * Wd).transpose(0, 2, 1)   # (BN,HdWd,L)
    out = (np.einsum('ck,bkl->bcl', np.asarray(weight, np.float64), flat)
           + np.asarray(bias, np.float64)[None, :, None])
    return out


# ---------------------------------- main --------------------------------------
if __name__ == "__main__":
    def run_case(BN, L, input_size, desire_size, Cp, key,
                 lane_tile=2048, in_dtype=jnp.float32, rtol=1e-4, atol=1e-4):
        HW = input_size[0] * input_size[1]
        HdWd = desire_size[0] * desire_size[1]
        k1, k2, k3 = jax.random.split(key, 3)
        token_coef = jax.random.normal(k1, (BN, 1, HW, L),
                                       dtype=jnp.float32).astype(in_dtype)
        # Conv1d(HdWd, Cp, 1) parameters with the kernel-size-1 dim squeezed.
        weight = jax.random.normal(k2, (Cp, HdWd), dtype=jnp.float32) * 0.05
        bias = jax.random.normal(k3, (Cp,), dtype=jnp.float32) * 0.05
        interp_mat = build_bilinear_matrix(desire_size, input_size)

        # One-time fusion of resize + conv, outside the hot path.
        wm, bias2 = fuse_pos_encoder_params(weight, bias, interp_mat)

        out = pos_encoder_pallas(token_coef, wm, bias2, lane_tile=lane_tile)
        out = jax.block_until_ready(out)
        assert out.shape == (BN, Cp, L)
        assert out.dtype == token_coef.dtype

        tc_f32 = np.asarray(token_coef.astype(jnp.float32))
        ref = ref_forward(tc_f32, input_size, desire_size,
                          np.asarray(weight), np.asarray(bias))
        np.testing.assert_allclose(np.asarray(out.astype(jnp.float32)), ref,
                                   rtol=rtol, atol=atol)

    key = jax.random.PRNGKey(0)
    k0, k1, k2, k3 = jax.random.split(key, 4)

    # 1) Small module-consistent shapes (L < 128): fallback lane-fold path, f32.
    run_case(BN=2, L=8, input_size=(16, 16), desire_size=(8, 8), Cp=32, key=k0)

    # 2) Primary batched path (L multiple of 128): grid=(BN, L/lt), no transpose.
    run_case(BN=2, L=256, input_size=(16, 16), desire_size=(8, 8), Cp=32, key=k1)

    # 3) Primary path with lane padding (L not a multiple of 128).
    run_case(BN=2, L=200, input_size=(16, 16), desire_size=(8, 8), Cp=32, key=k2)

    # 4) bf16 input + bf16 output writeback (f32 fused weight, f32 accumulation),
    #    BN=1 so the lane axis is split to keep >=2 parallel grid steps for v7x.
    run_case(BN=1, L=384, input_size=(16, 16), desire_size=(8, 8), Cp=32, key=k3,
             in_dtype=jnp.bfloat16, rtol=0.05, atol=0.05)

    print("KERNEL_OK")
</pallas_src>

<mosaic_0001>
module attributes {stable_mosaic.version = 11 : i64} {
  func.func @pos_encoder_kernel(%arg0: i32, %arg1: memref<256x128xf32, #tpu.memory_space<vmem>>, %arg2: memref<32x256xf32, #tpu.memory_space<vmem>>, %arg3: memref<32x1xf32, #tpu.memory_space<vmem>>, %arg4: memref<32x128xf32, #tpu.memory_space<vmem>>) attributes {dimension_semantics = [#tpu.dimension_semantics<parallel>], iteration_bounds = array<i64: 1>, scalar_prefetch = 0 : i64, scratch_operands = 0 : i64, tpu.core_type = #tpu.core_type<tc>, window_params = [{transform_indices = @transform_0, window_bounds = array<i64: 256, 128>}, {pipeline_mode = #tpu.pipeline_mode<synchronous>, transform_indices = @transform_1, window_bounds = array<i64: 32, 256>}, {pipeline_mode = #tpu.pipeline_mode<synchronous>, transform_indices = @transform_2, window_bounds = array<i64: 32, 1>}, {transform_indices = @transform_3, window_bounds = array<i64: 32, 128>}]} {
    %c0 = arith.constant 0 : index
    %c0_0 = arith.constant 0 : index
    %0 = vector.load %arg1[%c0, %c0_0] : memref<256x128xf32, #tpu.memory_space<vmem>>, vector<256x128xf32>
    %c0_1 = arith.constant 0 : index
    %c0_2 = arith.constant 0 : index
    %1 = vector.load %arg2[%c0_1, %c0_2] : memref<32x256xf32, #tpu.memory_space<vmem>>, vector<32x256xf32>
    %cst = arith.constant dense<0.000000e+00> : vector<32x128xf32>
    %2 = tpu.matmul %1, %0, %cst {dimension_numbers = #tpu.dot_dimension_numbers<[1], [0], [0], [1], [0, 0, 1, 1], [], []>} : vector<32x256xf32>, vector<256x128xf32>, vector<32x128xf32> -> vector<32x128xf32>
    %c0_3 = arith.constant 0 : index
    %c0_4 = arith.constant 0 : index
    %3 = vector.load %arg3[%c0_3, %c0_4] : memref<32x1xf32, #tpu.memory_space<vmem>>, vector<32x1xf32>
    %4 = vector.broadcast %3 : vector<32x1xf32> to vector<32x128xf32>
    %5 = arith.addf %2, %4 : vector<32x128xf32>
    %c0_5 = arith.constant 0 : index
    %c0_6 = arith.constant 0 : index
    %6 = vector.load %arg4[%c0_5, %c0_6] : memref<32x128xf32, #tpu.memory_space<vmem>>, vector<32x128xf32>
    tpu.vector_store %arg4[%c0_5, %c0_6], %5 {strides = array<i32>} : memref<32x128xf32, #tpu.memory_space<vmem>>, vector<32x128xf32>,
    return
  }
  func.func @transform_0(%arg0: i32) -> (i32, i32) {
    %c0_i32 = arith.constant 0 : i32
    %c0_i32_0 = arith.constant 0 : i32
    return %c0_i32, %arg0 : i32, i32
  }
  func.func @transform_1(%arg0: i32) -> (i32, i32) {
    %c0_i32 = arith.constant 0 : i32
    %c0_i32_0 = arith.constant 0 : i32
    %c0_i32_1 = arith.constant 0 : i32
    return %c0_i32, %c0_i32_0 : i32, i32
  }
  func.func @transform_2(%arg0: i32) -> (i32, i32) {
    %c0_i32 = arith.constant 0 : i32
    %c0_i32_0 = arith.constant 0 : i32
    %c0_i32_1 = arith.constant 0 : i32
    return %c0_i32, %c0_i32_0 : i32, i32
  }
  func.func @transform_3(%arg0: i32) -> (i32, i32) {
    %c0_i32 = arith.constant 0 : i32
    %c0_i32_0 = arith.constant 0 : i32
    return %c0_i32, %arg0 : i32, i32
  }
}

</mosaic_0001>

<llo_original>
// kernel: tpu_custom_call.1
$region0: #{tpu_custom_call.1}
  #allocation0 [shape = 'u32[]', space=smem, size = 0x4, offset = 0x4, fixed_abs, tag = 'smem constant byte address 0x4 - core index']
  #allocation1 [shape = 'u32[144,128]{1,0:T(1,128)}', space=vmem, size = 0x12000, scoped, tag = 'internal scratch']
  %s0 = inlined_call_operand.hbm [shape: f32[256,128], index: 0, kind: input, shape index: {}]
  %s1 = inlined_call_operand.hbm [shape: f32[32,256], index: 1, kind: input, shape index: {}]
  %s2 = inlined_call_operand.vmem [shape: f32[32,1], index: 2, kind: input, shape index: {}]
  %s3 = inlined_call_operand.hbm [shape: f32[32,128], index: 3, kind: output, shape index: {}]
  %s4 = sld [smem:[#allocation0]]
  $region30: #{tpu_custom_call.1} parent=0
    _
  %s6 = ssub.s32 1, %s4
  %s7 = scalar_select 0, %s6, %s4
  $region1: #{tpu_custom_call.1} parent=0
    #allocation2 [shape = 'u8[131072]{0}', space=vmem, size = 0x20000, scoped, tag = 'input window, operand 0, single buffered']
    #allocation3 [shape = 's32[1]{0}', space=sflag, size = 0x4, scoped, tag = 'scoped memory for tpu_custom_call.1']
    #allocation4 [shape = 's32[1]{0}', space=sflag, size = 0x4, scoped, tag = 'scoped memory for tpu_custom_call.1']
    #allocation5 [shape = 'u8[32768]{0}', space=vmem, size = 0x8000, scoped, tag = 'input window, operand 1, single buffered']
    #allocation6 [shape = 's32[1]{0}', space=sflag, size = 0x4, scoped, tag = 'scoped memory for tpu_custom_call.1']
    #allocation7 [shape = 'u8[16384]{0}', space=vmem, size = 0x4000, scoped, tag = 'output window, operand 0, single buffered']
    %8 = vsyncpa [#allocation3], 0
    %9 = vsyncpa [#allocation6], 0
    %10 = vsyncpa [#allocation4], 0
    // Predicated region
    $region2: #{tpu_custom_call.1} parent=1 // pred_check
      _
    $region3: #{tpu_custom_call.1} parent=1 // pred_check_branch
      %12 = sbr.rel (0) target = $region5
    $region4: #{tpu_custom_call.1} parent=1 // pred_region
      %s14 = ssub.s32 4096, 4096
      %15 = vsyncadd [#allocation3], %s14
      %s16 = sshll.u32 [#allocation2], 4
      %s17 = int_to_ptr.vmem [resolvable:$true] %s16
      %22 = dma.hbm_to_vmem [thread:$0]  %s0, 4096, %s17, [#allocation3], 128, 128, 8
    $region5: #{tpu_custom_call.1} parent=1 // pred_fallthru
      _
    // Predicated region
    $region6: #{tpu_custom_call.1} parent=1 // pred_check
      _
    $region7: #{tpu_custom_call.1} parent=1 // pred_check_branch
      %24 = sbr.rel (0) target = $region9
    $region8: #{tpu_custom_call.1} parent=1 // pred_region
      %s26 = ssub.s32 1024, 1024
      %27 = vsyncadd [#allocation6], %s26
      %s28 = sshll.u32 [#allocation5], 4
      %s29 = int_to_ptr.vmem [resolvable:$true] %s28
      %34 = dma.hbm_to_vmem [thread:$0]  %s1, 1024, %s29, [#allocation6], 256, 256, 16
    $region9: #{tpu_custom_call.1} parent=1 // pred_fallthru
      _
    // Predicated region
    $region10: #{tpu_custom_call.1} parent=1 // pred_check
      _
    $region11: #{tpu_custom_call.1} parent=1 // pred_check_branch
      %36 = sbr.rel (0) target = $region13
    $region12: #{tpu_custom_call.1} parent=1 // pred_region
      _
    $region13: #{tpu_custom_call.1} parent=1 // pred_fallthru
      _
    // Predicated region
    $region14: #{tpu_custom_call.1} parent=1 // pred_check
      _
    $region15: #{tpu_custom_call.1} parent=1 // pred_check_branch
      %38 = sbr.rel (0) target = $region17
    $region16: #{tpu_custom_call.1} parent=1 // pred_region
      %39 = dma.done [#allocation3], 4096
    $region17: #{tpu_custom_call.1} parent=1 // pred_fallthru
      _
    // Predicated region
    $region18: #{tpu_custom_call.1} parent=1 // pred_check
      _
    $region19: #{tpu_custom_call.1} parent=1 // pred_check_branch
      %41 = sbr.rel (0) target = $region21
    $region20: #{tpu_custom_call.1} parent=1 // pred_region
      %42 = dma.done [#allocation6], 1024
    $region21: #{tpu_custom_call.1} parent=1 // pred_fallthru
      _
    %v43 = vld [vmem:[#allocation2] sm:$0xff]
    %v44 = vld [vmem:[#allocation2 + $0x8] sm:$0xff]
    %v45 = vld [vmem:[#allocation2 + $0x10] sm:$0xff]
    %v46 = vld [vmem:[#allocation2 + $0x18] sm:$0xff]
    %v47 = vld [vmem:[#allocation2 + $0x20] sm:$0xff]
    %v48 = vld [vmem:[#allocation2 + $0x28] sm:$0xff]
    %v49 = vld [vmem:[#allocation2 + $0x30] sm:$0xff]
    %v50 = vld [vmem:[#allocation2 + $0x38] sm:$0xff]
    %v51 = vld [vmem:[#allocation2 + $0x40] sm:$0xff]
    %v52 = vld [vmem:[#allocation2 + $0x48] sm:$0xff]
    %v53 = vld [vmem:[#allocation2 + $0x50] sm:$0xff]
    %v54 = vld [vmem:[#allocation2 + $0x58] sm:$0xff]
    %v55 = vld [vmem:[#allocation2 + $0x60] sm:$0xff]
    %v56 = vld [vmem:[#allocation2 + $0x68] sm:$0xff]
    %v57 = vld [vmem:[#allocation2 + $0x70] sm:$0xff]
    %v58 = vld [vmem:[#allocation2 + $0x78] sm:$0xff]
    %v59 = vld [vmem:[#allocation2 + $0x80] sm:$0xff]
    %v60 = vld [vmem:[#allocation2 + $0x88] sm:$0xff]
    %v61 = vld [vmem:[#allocation2 + $0x90] sm:$0xff]
    %v62 = vld [vmem:[#allocation2 + $0x98] sm:$0xff]
    %v63 = vld [vmem:[#allocation2 + $0xa0] sm:$0xff]
    %v64 = vld [vmem:[#allocation2 + $0xa8] sm:$0xff]
    %v65 = vld [vmem:[#allocation2 + $0xb0] sm:$0xff]
    %v66 = vld [vmem:[#allocation2 + $0xb8] sm:$0xff]
    %v67 = vld [vmem:[#allocation2 + $0xc0] sm:$0xff]
    %v68 = vld [vmem:[#allocation2 + $0xc8] sm:$0xff]
    %v69 = vld [vmem:[#allocation2 + $0xd0] sm:$0xff]
    %v70 = vld [vmem:[#allocation2 + $0xd8] sm:$0xff]
    %v71 = vld [vmem:[#allocation2 + $0xe0] sm:$0xff]
    %v72 = vld [vmem:[#allocation2 + $0xe8] sm:$0xff]
    %v73 = vld [vmem:[#allocation2 + $0xf0] sm:$0xff]
    %v74 = vld [vmem:[#allocation2 + $0xf8] sm:$0xff]
    %v75 = vld [vmem:[#allocation5] sm:$0xff]
    %v76 = vld [vmem:[#allocation5 + $0x8] sm:$0xff]
    %v77 = vld [vmem:[#allocation5 + $0x10] sm:$0xff]
    %v78 = vld [vmem:[#allocation5 + $0x18] sm:$0xff]
    %v79 = vld [vmem:[#allocation5 + $0x20] sm:$0xff]
    %v80 = vld [vmem:[#allocation5 + $0x28] sm:$0xff]
    %v81 = vld [vmem:[#allocation5 + $0x30] sm:$0xff]
    %v82 = vld [vmem:[#allocation5 + $0x38] sm:$0xff]
    %v83 = vld [vmem:[%s2] sm:$0xff]
    %v84 = vld [vmem:[%s2 + $0x8] sm:$0xff]
    %v85 = vld [vmem:[%s2 + $0x10] sm:$0xff]
    %v86 = vld [vmem:[%s2 + $0x18] sm:$0xff]
    %88 = vset.pattern.permute.xlu0 0
    %89 = vperm.xlu0 %88, %v83
    %v90 = vpop.permute.xlu0 %89
    %93 = vset.pattern.permute.xlu0 0
    %94 = vperm.xlu0 %93, %v84
    %v95 = vpop.permute.xlu0 %94
    %98 = vset.pattern.permute.xlu0 0
    %99 = vperm.xlu0 %98, %v85
    %v100 = vpop.permute.xlu0 %99
    %103 = vset.pattern.permute.xlu0 0
    %104 = vperm.xlu0 %103, %v86
    %v105 = vpop.permute.xlu0 %104
    %107 = vmatprep.subr.mxu0 0.0
    %108 = vmatpush1.msra.mxu0 %v43
    %109 = vmatprep.subr.mxu0 0.0
    %110 = vmatpush1.msra.mxu0 %v44
    %111 = vmatprep.subr.mxu0 0.0
    %112 = vmatpush1.msra.mxu0 %v45
    %113 = vmatprep.subr.mxu0 0.0
    %114 = vmatpush1.msra.mxu0 %v46
    %115 = vmatprep.subr.mxu0 0.0
    %116 = vmatpush1.msra.mxu0 %v47
    %117 = vmatprep.subr.mxu0 0.0
    %118 = vmatpush1.msra.mxu0 %v48
    %119 = vmatprep.subr.mxu0 0.0
    %120 = vmatpush1.msra.mxu0 %v49
    %121 = vmatprep.subr.mxu0 0.0
    %122 = vmatpush1.msra.mxu0 %v50
    %123 = vmatprep.subr.mxu0 0.0
    %124 = vmatpush1.msra.mxu0 %v51
    %125 = vmatprep.subr.mxu0 0.0
    %126 = vmatpush1.msra.mxu0 %v52
    %127 = vmatprep.subr.mxu0 0.0
    %128 = vmatpush1.msra.mxu0 %v53
    %129 = vmatprep.subr.mxu0 0.0
    %130 = vmatpush1.msra.mxu0 %v54
    %131 = vmatprep.subr.mxu0 0.0
    %132 = vmatpush1.msra.mxu0 %v55
    %133 = vmatprep.subr.mxu0 0.0
    %134 = vmatpush1.msra.mxu0 %v56
    %135 = vmatprep.subr.mxu0 0.0
    %136 = vmatpush1.msra.mxu0 %v57
    %137 = vmatprep.subr.mxu0 0.0
    %138 = vmatpush1.msra.mxu0 %v58
    %139 = vmatprep.subr.mxu0 0.0
    %140 = vmatpush1.msra.mxu0 %v59
    %141 = vmatprep.subr.mxu0 0.0
    %142 = vmatpush1.msra.mxu0 %v60
    %143 = vmatprep.subr.mxu0 0.0
    %144 = vmatpush1.msra.mxu0 %v61
    %145 = vmatprep.subr.mxu0 0.0
    %146 = vmatpush1.msra.mxu0 %v62
    %147 = vmatprep.subr.mxu0 0.0
    %148 = vmatpush1.msra.mxu0 %v63
    %149 = vmatprep.subr.mxu0 0.0
    %150 = vmatpush1.msra.mxu0 %v64
    %151 = vmatprep.subr.mxu0 0.0
    %152 = vmatpush1.msra.mxu0 %v65
    %153 = vmatprep.subr.mxu0 0.0
    %154 = vmatpush1.msra.mxu0 %v66
    %155 = vmatprep.subr.mxu0 0.0
    %156 = vmatpush1.msra.mxu0 %v67
    %157 = vmatprep.subr.mxu0 0.0
    %158 = vmatpush1.msra.mxu0 %v68
    %159 = vmatprep.subr.mxu0 0.0
    %160 = vmatpush1.msra.mxu0 %v69
    %161 = vmatprep.subr.mxu0 0.0
    %162 = vmatpush1.msra.mxu0 %v70
    %163 = vmatprep.subr.mxu0 0.0
    %164 = vmatpush1.msra.mxu0 %v71
    %165 = vmatprep.subr.mxu0 0.0
    %166 = vmatpush1.msra.mxu0 %v72
    %167 = vmatprep.subr.mxu0 0.0
    %168 = vmatpush1.msra.mxu0 %v73
    %169 = vmatprep.subr.mxu0 0.0
    %170 = vmatpush1.msra.mxu0 %v74
    %171 = vmatprep.mubr.f32.mxu0 %v76
    %172 = vmatmul.mubr.f32.gmra.mrb[0].mxu0 %v75
    %v173 = vpop.f32.mrb[0].mxu0
    %v174 = vadd.f32 %v90, %v173
    %v175 = vpop.f32.mrb[0].mxu0
    %176 = vmatprep.mubr.f32.mxu0 %v78
    %177 = vmatmul.mubr.f32.gmra.mrb[0].mxu0 %v77
    %v178 = vpop.f32.mrb[0].mxu0
    %v179 = vadd.f32 %v95, %v178
    %v180 = vpop.f32.mrb[0].mxu0
    %181 = vmatprep.mubr.f32.mxu0 %v80
    %182 = vmatmul.mubr.f32.gmra.mrb[0].mxu0 %v79
    %v183 = vpop.f32.mrb[0].mxu0
    %v184 = vadd.f32 %v100, %v183
    %v185 = vpop.f32.mrb[0].mxu0
    %186 = vmatprep.mubr.f32.mxu0 %v82
    %187 = vmatmul.mubr.f32.gmra.mrb[0].mxu0 %v81
    %v188 = vpop.f32.mrb[0].mxu0
    %v189 = vadd.f32 %v105, %v188
    %v190 = vpop.f32.mrb[0].mxu0
    %191 = vdwg.mxu0
    %192 = vst [vmem:[#allocation7] sm:$0xff] %v174
    %193 = vst [vmem:[#allocation7 + $0x8] sm:$0xff] %v179
    %194 = vst [vmem:[#allocation7 + $0x10] sm:$0xff] %v184
    %195 = vst [vmem:[#allocation7 + $0x18] sm:$0xff] %v189
    // Predicated region
    $region22: #{tpu_custom_call.1} parent=1 // pred_check
      _
    $region23: #{tpu_custom_call.1} parent=1 // pred_check_branch
      %197 = sbr.rel (0) target = $region25
    $region24: #{tpu_custom_call.1} parent=1 // pred_region
      %s199 = ssub.s32 512, 512
      %200 = vsyncadd [#allocation4], %s199
      %s201 = sshll.u32 [#allocation7], 4
      %s202 = int_to_ptr.vmem [resolvable:$true] %s201
      %207 = dma.vmem_to_hbm [thread:$0]  %s202, 512, %s3, [#allocation4], 128, 128, 8
    $region25: #{tpu_custom_call.1} parent=1 // pred_fallthru
      _
    // Predicated region
    $region26: #{tpu_custom_call.1} parent=1 // pred_check
      _
    $region27: #{tpu_custom_call.1} parent=1 // pred_check_branch
      %209 = sbr.rel (0) target = $region29
    $region28: #{tpu_custom_call.1} parent=1 // pred_region
      %210 = dma.done [#allocation4], 512
    $region29: #{tpu_custom_call.1} parent=1 // pred_fallthru
      _
    %211 = vsyncpa [#allocation3], 1
    %212 = vsyncpa [#allocation6], 1
    %213 = vsyncpa [#allocation4], 1

</llo_original>
